<compile_context>
chip_gen: v7x
topology: tpu7x:2x2x1
jax: 0.10.0
libtpu: 0.0.40
codegen_flags: <defaults>
</compile_context>

<pallas_src>
import functools

import jax
import jax.numpy as jnp
from jax.experimental import pallas as pl
from jax.experimental.pallas import tpu as pltpu


def _wce3d_kernel(x_ref, t_ref, w_ref, out_ref, acc_ref, *,
                  num_classes, rows_per_tile, tiles_per_super, rows_valid):
    s = pl.program_id(1)       # voxel super-block (parallel)
    ti = pl.program_id(2)      # inner voxel tile (arbitrary / accumulated)

    @pl.when(ti == 0)
    def _():
        acc_ref[...] = jnp.zeros_like(acc_ref)

    tgt = t_ref[...]                               # (R, 128) int32 labels
    wm = w_ref[...].astype(jnp.float32)            # (R, 128) voxel weights

    # ---- class-axis reduction with a short unrolled loop over C; every op is a
    # dense (R, 128) slab (full lane/sublane utilization, no cross-sublane work).
    # Max pass in the native dtype (exact even in bf16), single upcast after.
    m = x_ref[0]
    for c in range(1, num_classes):
        m = jnp.maximum(m, x_ref[c])
    m = m.astype(jnp.float32)

    se = jnp.zeros(m.shape, jnp.float32)
    xt = jnp.zeros(m.shape, jnp.float32)
    for c in range(num_classes):
        xc = x_ref[c].astype(jnp.float32)
        se = se + jnp.exp(xc - m)
        xt = xt + jnp.where(tgt == c, xc, 0.0)

    # -log p_target = log(sum exp(x - m)) + m - x_target ; weighted per voxel.
    loss = (jnp.log(se) + m - xt) * wm             # (R, 128)

    # Unclamped global row-block index (the index_map clamps the DMA so no block
    # is fully out of bounds; invalid rows are neutralized here with a select,
    # so garbage logits in ragged edge blocks can never produce NaN/Inf output).
    rb = s * tiles_per_super + ti
    row0 = rb * rows_per_tile

    @pl.when(row0 + rows_per_tile <= rows_valid)
    def _():                                       # fully-valid tile: no mask work
        acc_ref[...] += loss

    @pl.when(row0 + rows_per_tile > rows_valid)
    def _():                                       # ragged / duplicated tail tile
        rows = row0 + jax.lax.broadcasted_iota(jnp.int32, loss.shape, 0)
        acc_ref[...] += jnp.where(rows < rows_valid, loss, 0.0)

    @pl.when(ti == pl.num_programs(2) - 1)
    def _():
        out_ref[...] = jnp.broadcast_to(jnp.sum(acc_ref[...]), out_ref.shape)


def weighted_cross_entropy_3d(predict, target, weight_map=None, *,
                              weight=None, size_average=True, ignore_label=255,
                              vmem_budget_bytes=16 << 20):
    """Pallas port of WeightedCrossEntropy3d.forward.

    predict: (N, C, H, W, D) float (f32 or bf16), target: (N, H, W, D) int,
    weight_map: (N, H, W, D) float (defaults to ones).  `weight` is the optional
    per-class rescaling of nn.NLLLoss, folded into the voxel weight map.
    `size_average` / `ignore_label` are accepted for signature parity but, as in
    the reference forward, do not change the math (it always divides by N*H*W*D
    and never masks ignore_label).
    """
    N, C, H, W, D = predict.shape
    assert target.shape == (N, H, W, D)
    P = H * W * D

    if weight_map is None:
        weight_map = jnp.ones((N, H, W, D), jnp.float32)
    weight_map = weight_map.astype(jnp.float32)
    if weight is not None:
        # nn.NLLLoss(weight=...) per-class rescaling, folded in per voxel.
        weight_map = weight_map * jnp.asarray(weight, jnp.float32)[target]

    x = predict.reshape(N, C, P)
    t = target.reshape(N, P).astype(jnp.int32)
    wm = weight_map.reshape(N, P)

    # Re-block the voxel axis as (rows, 128): lanes fully dense, classes on a
    # leading (untiled) axis.  Free when P % 128 == 0 (the usual case for 3-D
    # volumes).  Otherwise pad <=127 voxels (wm = 0 there -> zero contribution).
    p_pad = pl.cdiv(P, 128) * 128
    if p_pad != P:
        # TODO(synk): rare fallback copy; only hit when H*W*D % 128 != 0.
        x = jnp.pad(x, ((0, 0), (0, 0), (0, p_pad - P)))
        t = jnp.pad(t, ((0, 0), (0, p_pad - P)))
        wm = jnp.pad(wm, ((0, 0), (0, p_pad - P)))
    rows_valid = p_pad // 128
    x = x.reshape(N, C, rows_valid, 128)
    t = t.reshape(N, rows_valid, 128)
    wm = wm.reshape(N, rows_valid, 128)

    # ---- tile size (rows of 128 lanes per grid step) from a VMEM budget that
    # counts double-buffered input blocks (x in its input dtype, t int32, wm
    # f32), the f32 accumulator and headroom for f32 temporaries.  16 MiB keeps
    # it safe on every generation (v7x has only 64 MiB physical VMEM).
    in_item = jnp.dtype(predict.dtype).itemsize
    bytes_per_row = 128 * (2 * (C * in_item + 4 + 4) + 4 + 8 * 4)
    R = max(8, min(vmem_budget_bytes // bytes_per_row, 2048))
    R = (R // 8) * 8
    if R >= rows_valid:
        R = ((rows_valid + 7) // 8) * 8        # single (possibly ragged) tile
    n_tiles = pl.cdiv(rows_valid, R)

    # ---- super-block split of the voxel axis so both v7x TensorCores get work
    # even at N == 1 (harmless extra sequential axis on single-TC v5e/v6e).
    S = 2 if n_tiles >= 2 else 1
    T = pl.cdiv(n_tiles, S)

    def _row_block(s, ti):
        rb = s * T + ti
        if S * T != n_tiles:                   # clamp: never issue a fully-OOB DMA
            rb = jnp.minimum(rb, n_tiles - 1)
        return rb

    def x_map(n, s, ti):
        return (n, 0, _row_block(s, ti), 0)

    def tw_map(n, s, ti):
        return (n, _row_block(s, ti), 0)

    kernel = functools.partial(
        _wce3d_kernel, num_classes=C, rows_per_tile=R,
        tiles_per_super=T, rows_valid=rows_valid)

    cost = pl.CostEstimate(
        flops=int(8 * N * C * P),
        transcendentals=int(N * (C + 1) * P),
        bytes_accessed=int(N * P * (C * in_item + 8) + N * S * 8 * 128 * 4))

    out = pl.pallas_call(
        kernel,
        out_shape=jax.ShapeDtypeStruct((N, S, 8, 128), jnp.float32),
        grid_spec=pltpu.PrefetchScalarGridSpec(
            num_scalar_prefetch=0,
            grid=(N, S, T),
            in_specs=[
                pl.BlockSpec((None, C, R, 128), x_map),
                pl.BlockSpec((None, R, 128), tw_map),
                pl.BlockSpec((None, R, 128), tw_map),
            ],
            out_specs=pl.BlockSpec((1, 1, 8, 128), lambda n, s, ti: (n, s, 0, 0)),
            scratch_shapes=[pltpu.VMEM((R, 128), jnp.float32)],
        ),
        compiler_params=pltpu.CompilerParams(
            dimension_semantics=("parallel", "parallel", "arbitrary"),
            vmem_limit_bytes=32 << 20),
        cost_estimate=cost,
    )(x, t, wm)

    return jnp.sum(out[:, :, 0, 0]) / jnp.float32(N * P)


def _wce3d_ref(predict, target, weight_map, weight=None):
    """Pure-JAX reference matching the PyTorch forward."""
    n, c, h, w, d = predict.shape
    logp = jax.nn.log_softmax(predict.astype(jnp.float32), axis=1)
    onehot = jax.nn.one_hot(target, c, axis=1, dtype=jnp.float32)
    voxel = -jnp.sum(logp * onehot, axis=1)       # (N, H, W, D)
    if weight is not None:
        voxel = voxel * jnp.asarray(weight, jnp.float32)[target]
    return jnp.sum(weight_map.astype(jnp.float32) * voxel) / (n * h * w * d)


if __name__ == "__main__":
    key = jax.random.PRNGKey(0)
    kx, kt, kw = jax.random.split(key, 3)

    N, C, H, W, D = 2, 4, 16, 16, 8
    predict = jax.random.normal(kx, (N, C, H, W, D), dtype=jnp.float32)
    target = jax.random.randint(kt, (N, H, W, D), 0, C, dtype=jnp.int32)
    weight_map = jax.random.uniform(kw, (N, H, W, D), jnp.float32, 0.5, 1.5)

    loss = weighted_cross_entropy_3d(predict, target, weight_map)
    loss = jax.block_until_ready(loss)

    ref = _wce3d_ref(predict, target, weight_map)
    assert jnp.allclose(loss, ref, rtol=1e-5, atol=1e-5), (loss, ref)

    print("KERNEL_OK")
</pallas_src>

<mosaic_0001>
module attributes {stable_mosaic.version = 11 : i64} {
  func.func @_wce3d_kernel(%arg0: i32, %arg1: i32, %arg2: i32, %arg3: memref<1x4x16x128xf32, #tpu.memory_space<vmem>>, %arg4: memref<1x16x128xi32, #tpu.memory_space<vmem>>, %arg5: memref<1x16x128xf32, #tpu.memory_space<vmem>>, %arg6: memref<1x1x8x128xf32, #tpu.memory_space<vmem>>, %arg7: memref<16x128xf32, #tpu.memory_space<vmem>>) attributes {dimension_semantics = [#tpu.dimension_semantics<parallel>, #tpu.dimension_semantics<parallel>, #tpu.dimension_semantics<arbitrary>], iteration_bounds = array<i64: 2, 1, 1>, scalar_prefetch = 0 : i64, scratch_operands = 1 : i64, tpu.core_type = #tpu.core_type<tc>, window_params = [{transform_indices = @transform_0, window_bounds = array<i64: 1, 4, 16, 128>}, {transform_indices = @transform_1, window_bounds = array<i64: 1, 16, 128>}, {transform_indices = @transform_2, window_bounds = array<i64: 1, 16, 128>}, {transform_indices = @transform_3, window_bounds = array<i64: 1, 1, 8, 128>}]} {
    %c0_i32 = arith.constant 0 : i32
    %0 = arith.cmpi eq, %arg2, %c0_i32 : i32
    %1 = arith.extui %0 : i1 to i32
    %c0_i32_0 = arith.constant 0 : i32
    %2 = arith.cmpi ne, %1, %c0_i32_0 : i32
    scf.if %2 {
      %cst_50 = arith.constant 0.000000e+00 : f32
      %78 = vector.broadcast %cst_50 : f32 to vector<16x128xf32>
      %c0_51 = arith.constant 0 : index
      %c0_52 = arith.constant 0 : index
      %79 = vector.load %arg7[%c0_51, %c0_52] : memref<16x128xf32, #tpu.memory_space<vmem>>, vector<16x128xf32>
      tpu.vector_store %arg7[%c0_51, %c0_52], %78 {strides = array<i32>} : memref<16x128xf32, #tpu.memory_space<vmem>>, vector<16x128xf32>,
    } else {
    }
    %c0 = arith.constant 0 : index
    %c0_1 = arith.constant 0 : index
    %c0_2 = arith.constant 0 : index
    %3 = vector.load %arg4[%c0, %c0_1, %c0_2] : memref<1x16x128xi32, #tpu.memory_space<vmem>>, vector<1x16x128xi32>
    %4 = vector.shape_cast %3 : vector<1x16x128xi32> to vector<16x128xi32>
    %c0_3 = arith.constant 0 : index
    %c0_4 = arith.constant 0 : index
    %c0_5 = arith.constant 0 : index
    %5 = vector.load %arg5[%c0_3, %c0_4, %c0_5] : memref<1x16x128xf32, #tpu.memory_space<vmem>>, vector<1x16x128xf32>
    %6 = vector.shape_cast %5 : vector<1x16x128xf32> to vector<16x128xf32>
    %c0_6 = arith.constant 0 : index
    %c0_7 = arith.constant 0 : index
    %c0_8 = arith.constant 0 : index
    %c0_9 = arith.constant 0 : index
    %7 = vector.load %arg3[%c0_6, %c0_7, %c0_8, %c0_9] : memref<1x4x16x128xf32, #tpu.memory_space<vmem>>, vector<1x1x16x128xf32>
    %8 = vector.shape_cast %7 : vector<1x1x16x128xf32> to vector<16x128xf32>
    %c0_10 = arith.constant 0 : index
    %c1 = arith.constant 1 : index
    %c0_11 = arith.constant 0 : index
    %c0_12 = arith.constant 0 : index
    %9 = vector.load %arg3[%c0_10, %c1, %c0_11, %c0_12] : memref<1x4x16x128xf32, #tpu.memory_space<vmem>>, vector<1x1x16x128xf32>
    %10 = vector.shape_cast %9 : vector<1x1x16x128xf32> to vector<16x128xf32>
    %11 = arith.maximumf %8, %10 : vector<16x128xf32>
    %c0_13 = arith.constant 0 : index
    %c2 = arith.constant 2 : index
    %c0_14 = arith.constant 0 : index
    %c0_15 = arith.constant 0 : index
    %12 = vector.load %arg3[%c0_13, %c2, %c0_14, %c0_15] : memref<1x4x16x128xf32, #tpu.memory_space<vmem>>, vector<1x1x16x128xf32>
    %13 = vector.shape_cast %12 : vector<1x1x16x128xf32> to vector<16x128xf32>
    %14 = arith.maximumf %11, %13 : vector<16x128xf32>
    %c0_16 = arith.constant 0 : index
    %c3 = arith.constant 3 : index
    %c0_17 = arith.constant 0 : index
    %c0_18 = arith.constant 0 : index
    %15 = vector.load %arg3[%c0_16, %c3, %c0_17, %c0_18] : memref<1x4x16x128xf32, #tpu.memory_space<vmem>>, vector<1x1x16x128xf32>
    %16 = vector.shape_cast %15 : vector<1x1x16x128xf32> to vector<16x128xf32>
    %17 = arith.maximumf %14, %16 : vector<16x128xf32>
    %cst = arith.constant 0.000000e+00 : f32
    %18 = vector.broadcast %cst : f32 to vector<16x128xf32>
    %cst_19 = arith.constant 0.000000e+00 : f32
    %19 = vector.broadcast %cst_19 : f32 to vector<16x128xf32>
    %c0_20 = arith.constant 0 : index
    %c0_21 = arith.constant 0 : index
    %c0_22 = arith.constant 0 : index
    %c0_23 = arith.constant 0 : index
    %20 = vector.load %arg3[%c0_20, %c0_21, %c0_22, %c0_23] : memref<1x4x16x128xf32, #tpu.memory_space<vmem>>, vector<1x1x16x128xf32>
    %21 = vector.shape_cast %20 : vector<1x1x16x128xf32> to vector<16x128xf32>
    %22 = arith.subf %21, %17 : vector<16x128xf32>
    %23 = math.exp %22 : vector<16x128xf32>
    %24 = arith.addf %18, %23 : vector<16x128xf32>
    %c0_i32_24 = arith.constant 0 : i32
    %25 = vector.broadcast %c0_i32_24 : i32 to vector<16x128xi32>
    %26 = arith.cmpi eq, %4, %25 : vector<16x128xi32>
    %cst_25 = arith.constant 0.000000e+00 : f32
    %27 = vector.broadcast %cst_25 : f32 to vector<16x128xf32>
    %28 = arith.select %26, %21, %27 : vector<16x128xi1>, vector<16x128xf32>
    %29 = arith.addf %19, %28 : vector<16x128xf32>
    %c0_26 = arith.constant 0 : index
    %c1_27 = arith.constant 1 : index
    %c0_28 = arith.constant 0 : index
    %c0_29 = arith.constant 0 : index
    %30 = vector.load %arg3[%c0_26, %c1_27, %c0_28, %c0_29] : memref<1x4x16x128xf32, #tpu.memory_space<vmem>>, vector<1x1x16x128xf32>
    %31 = vector.shape_cast %30 : vector<1x1x16x128xf32> to vector<16x128xf32>
    %32 = arith.subf %31, %17 : vector<16x128xf32>
    %33 = math.exp %32 : vector<16x128xf32>
    %34 = arith.addf %24, %33 : vector<16x128xf32>
    %c1_i32 = arith.constant 1 : i32
    %35 = vector.broadcast %c1_i32 : i32 to vector<16x128xi32>
    %36 = arith.cmpi eq, %4, %35 : vector<16x128xi32>
    %cst_30 = arith.constant 0.000000e+00 : f32
    %37 = vector.broadcast %cst_30 : f32 to vector<16x128xf32>
    %38 = arith.select %36, %31, %37 : vector<16x128xi1>, vector<16x128xf32>
    %39 = arith.addf %29, %38 : vector<16x128xf32>
    %c0_31 = arith.constant 0 : index
    %c2_32 = arith.constant 2 : index
    %c0_33 = arith.constant 0 : index
    %c0_34 = arith.constant 0 : index
    %40 = vector.load %arg3[%c0_31, %c2_32, %c0_33, %c0_34] : memref<1x4x16x128xf32, #tpu.memory_space<vmem>>, vector<1x1x16x128xf32>
    %41 = vector.shape_cast %40 : vector<1x1x16x128xf32> to vector<16x128xf32>
    %42 = arith.subf %41, %17 : vector<16x128xf32>
    %43 = math.exp %42 : vector<16x128xf32>
    %44 = arith.addf %34, %43 : vector<16x128xf32>
    %c2_i32 = arith.constant 2 : i32
    %45 = vector.broadcast %c2_i32 : i32 to vector<16x128xi32>
    %46 = arith.cmpi eq, %4, %45 : vector<16x128xi32>
    %cst_35 = arith.constant 0.000000e+00 : f32
    %47 = vector.broadcast %cst_35 : f32 to vector<16x128xf32>
    %48 = arith.select %46, %41, %47 : vector<16x128xi1>, vector<16x128xf32>
    %49 = arith.addf %39, %48 : vector<16x128xf32>
    %c0_36 = arith.constant 0 : index
    %c3_37 = arith.constant 3 : index
    %c0_38 = arith.constant 0 : index
    %c0_39 = arith.constant 0 : index
    %50 = vector.load %arg3[%c0_36, %c3_37, %c0_38, %c0_39] : memref<1x4x16x128xf32, #tpu.memory_space<vmem>>, vector<1x1x16x128xf32>
    %51 = vector.shape_cast %50 : vector<1x1x16x128xf32> to vector<16x128xf32>
    %52 = arith.subf %51, %17 : vector<16x128xf32>
    %53 = math.exp %52 : vector<16x128xf32>
    %54 = arith.addf %44, %53 : vector<16x128xf32>
    %c3_i32 = arith.constant 3 : i32
    %55 = vector.broadcast %c3_i32 : i32 to vector<16x128xi32>
    %56 = arith.cmpi eq, %4, %55 : vector<16x128xi32>
    %cst_40 = arith.constant 0.000000e+00 : f32
    %57 = vector.broadcast %cst_40 : f32 to vector<16x128xf32>
    %58 = arith.select %56, %51, %57 : vector<16x128xi1>, vector<16x128xf32>
    %59 = arith.addf %49, %58 : vector<16x128xf32>
    %60 = math.log %54 : vector<16x128xf32>
    %61 = arith.addf %60, %17 : vector<16x128xf32>
    %62 = arith.subf %61, %59 : vector<16x128xf32>
    %63 = arith.mulf %62, %6 : vector<16x128xf32>
    %c1_i32_41 = arith.constant 1 : i32
    %64 = arith.muli %arg1, %c1_i32_41 : i32
    %65 = arith.addi %64, %arg2 : i32
    %c16_i32 = arith.constant 16 : i32
    %66 = arith.muli %65, %c16_i32 : i32
    %c16_i32_42 = arith.constant 16 : i32
    %67 = arith.addi %66, %c16_i32_42 : i32
    %c16_i32_43 = arith.constant 16 : i32
    %68 = arith.cmpi sle, %67, %c16_i32_43 : i32
    %69 = arith.extui %68 : i1 to i32
    %c0_i32_44 = arith.constant 0 : i32
    %70 = arith.cmpi ne, %69, %c0_i32_44 : i32
    scf.if %70 {
      %c0_50 = arith.constant 0 : index
      %c0_51 = arith.constant 0 : index
      %78 = vector.load %arg7[%c0_50, %c0_51] : memref<16x128xf32, #tpu.memory_space<vmem>>, vector<16x128xf32>
      %79 = arith.addf %78, %63 : vector<16x128xf32>
      %c0_52 = arith.constant 0 : index
      %c0_53 = arith.constant 0 : index
      %80 = vector.load %arg7[%c0_52, %c0_53] : memref<16x128xf32, #tpu.memory_space<vmem>>, vector<16x128xf32>
      tpu.vector_store %arg7[%c0_52, %c0_53], %79 {strides = array<i32>} : memref<16x128xf32, #tpu.memory_space<vmem>>, vector<16x128xf32>,
    } else {
    }
    %c16_i32_45 = arith.constant 16 : i32
    %71 = arith.addi %66, %c16_i32_45 : i32
    %c16_i32_46 = arith.constant 16 : i32
    %72 = arith.cmpi sgt, %71, %c16_i32_46 : i32
    %73 = arith.extui %72 : i1 to i32
    %c0_i32_47 = arith.constant 0 : i32
    %74 = arith.cmpi ne, %73, %c0_i32_47 : i32
    scf.if %74 {
      %78 = tpu.iota {dimensions = array<i32: 0>} : vector<16x128xi32>
      %79 = vector.broadcast %66 : i32 to vector<16x128xi32>
      %80 = arith.addi %79, %78 : vector<16x128xi32>
      %c0_50 = arith.constant 0 : index
      %c0_51 = arith.constant 0 : index
      %81 = vector.load %arg7[%c0_50, %c0_51] : memref<16x128xf32, #tpu.memory_space<vmem>>, vector<16x128xf32>
      %c16_i32_52 = arith.constant 16 : i32
      %82 = vector.broadcast %c16_i32_52 : i32 to vector<16x128xi32>
      %83 = arith.cmpi slt, %80, %82 : vector<16x128xi32>
      %cst_53 = arith.constant 0.000000e+00 : f32
      %84 = vector.broadcast %cst_53 : f32 to vector<16x128xf32>
      %85 = arith.select %83, %63, %84 : vector<16x128xi1>, vector<16x128xf32>
      %86 = arith.addf %81, %85 : vector<16x128xf32>
      %c0_54 = arith.constant 0 : index
      %c0_55 = arith.constant 0 : index
      %87 = vector.load %arg7[%c0_54, %c0_55] : memref<16x128xf32, #tpu.memory_space<vmem>>, vector<16x128xf32>
      tpu.vector_store %arg7[%c0_54, %c0_55], %86 {strides = array<i32>} : memref<16x128xf32, #tpu.memory_space<vmem>>, vector<16x128xf32>,
    } else {
    }
    %c0_i32_48 = arith.constant 0 : i32
    %75 = arith.cmpi eq, %arg2, %c0_i32_48 : i32
    %76 = arith.extui %75 : i1 to i32
    %c0_i32_49 = arith.constant 0 : i32
    %77 = arith.cmpi ne, %76, %c0_i32_49 : i32
    scf.if %77 {
      %c0_50 = arith.constant 0 : index
      %c0_51 = arith.constant 0 : index
      %78 = vector.load %arg7[%c0_50, %c0_51] : memref<16x128xf32, #tpu.memory_space<vmem>>, vector<16x128xf32>
      %79 = vector.shape_cast %78 : vector<16x128xf32> to vector<1x16x128xf32>
      %cst_52 = arith.constant dense<0.000000e+00> : vector<1xf32>
      %80 = vector.multi_reduction <add>, %79, %cst_52 [1, 2] : vector<1x16x128xf32> to vector<1xf32>
      %81 = vector.shape_cast %80 : vector<1xf32> to vector<1x1x1xf32>
      %82 = vector.extract %81[0, 0, 0] : f32 from vector<1x1x1xf32>
      %83 = vector.broadcast %82 : f32 to vector<1x1x8x128xf32>
      %c0_53 = arith.constant 0 : index
      %c0_54 = arith.constant 0 : index
      %c0_55 = arith.constant 0 : index
      %c0_56 = arith.constant 0 : index
      %84 = vector.load %arg6[%c0_53, %c0_54, %c0_55, %c0_56] : memref<1x1x8x128xf32, #tpu.memory_space<vmem>>, vector<1x1x8x128xf32>
      tpu.vector_store %arg6[%c0_53, %c0_54, %c0_55, %c0_56], %83 {strides = array<i32>} : memref<1x1x8x128xf32, #tpu.memory_space<vmem>>, vector<1x1x8x128xf32>,
    } else {
    }
    return
  }
  func.func @transform_0(%arg0: i32, %arg1: i32, %arg2: i32) -> (i32, i32, i32, i32) {
    %c1_i32 = arith.constant 1 : i32
    %0 = arith.muli %arg1, %c1_i32 : i32
    %1 = arith.addi %0, %arg2 : i32
    %c0_i32 = arith.constant 0 : i32
    %c0_i32_0 = arith.constant 0 : i32
    %c0_i32_1 = arith.constant 0 : i32
    return %arg0, %c0_i32, %1, %c0_i32_0 : i32, i32, i32, i32
  }
  func.func @transform_1(%arg0: i32, %arg1: i32, %arg2: i32) -> (i32, i32, i32) {
    %c1_i32 = arith.constant 1 : i32
    %0 = arith.muli %arg1, %c1_i32 : i32
    %1 = arith.addi %0, %arg2 : i32
    %c0_i32 = arith.constant 0 : i32
    %c0_i32_0 = arith.constant 0 : i32
    return %arg0, %1, %c0_i32 : i32, i32, i32
  }
  func.func @transform_2(%arg0: i32, %arg1: i32, %arg2: i32) -> (i32, i32, i32) {
    %c1_i32 = arith.constant 1 : i32
    %0 = arith.muli %arg1, %c1_i32 : i32
    %1 = arith.addi %0, %arg2 : i32
    %c0_i32 = arith.constant 0 : i32
    %c0_i32_0 = arith.constant 0 : i32
    return %arg0, %1, %c0_i32 : i32, i32, i32
  }
  func.func @transform_3(%arg0: i32, %arg1: i32, %arg2: i32) -> (i32, i32, i32, i32) {
    %c0_i32 = arith.constant 0 : i32
    %c0_i32_0 = arith.constant 0 : i32
    %c0_i32_1 = arith.constant 0 : i32
    return %arg0, %arg1, %c0_i32, %c0_i32_0 : i32, i32, i32, i32
  }
}

</mosaic_0001>

<llo_original>
// kernel: tpu_custom_call.1
$region0: #{tpu_custom_call.1}
  #allocation0 [shape = 'u32[]', space=smem, size = 0x4, offset = 0x4, fixed_abs, tag = 'smem constant byte address 0x4 - core index']
  #allocation1 [shape = 'u32[144,128]{1,0:T(1,128)}', space=vmem, size = 0x12000, scoped, tag = 'internal scratch']
  #allocation2 [shape = 'f32[16,128]{1,0:T(8,128)}', space=vmem, size = 0x2000, scoped, tag = 'scratch operand']
  %s0 = inlined_call_operand.hbm [shape: f32[2,4,16,128], index: 0, kind: input, shape index: {}]
  %s1 = inlined_call_operand.hbm [shape: s32[2,16,128], index: 1, kind: input, shape index: {}]
  %s2 = inlined_call_operand.hbm [shape: f32[2,16,128], index: 2, kind: input, shape index: {}]
  %s3 = inlined_call_operand.hbm [shape: f32[2,1,8,128], index: 3, kind: output, shape index: {}]
  %s4 = sld [smem:[#allocation0]]
  $region73: #{tpu_custom_call.1} parent=0
    _
  %s6 = ssub.s32 1, %s4
  %s7 = scalar_select 0, %s6, %s4
  $region1: #{tpu_custom_call.1} parent=0
    #allocation3 [shape = 'u8[65536]{0}', space=vmem, size = 0x10000, scoped, tag = 'input window, operand 0']
    #allocation4 [shape = 's32[2]{0}', space=sflag, size = 0x8, scoped, tag = 'scoped memory for tpu_custom_call.1']
    #allocation5 [shape = 's32[2]{0}', space=sflag, size = 0x8, scoped, tag = 'scoped memory for tpu_custom_call.1']
    #allocation6 [shape = 'u8[16384]{0}', space=vmem, size = 0x4000, scoped, tag = 'input window, operand 1']
    #allocation7 [shape = 's32[2]{0}', space=sflag, size = 0x8, scoped, tag = 'scoped memory for tpu_custom_call.1']
    #allocation8 [shape = 'u8[16384]{0}', space=vmem, size = 0x4000, scoped, tag = 'input window, operand 2']
    #allocation9 [shape = 'u8[8192]{0}', space=vmem, size = 0x2000, scoped, tag = 'output window, operand 0']
    %8 = vsyncpa [#allocation4], 0
    %s9 = scalar_lea.sflag [#allocation4], 1
    %10 = vsyncpa %s9, 0
    %11 = vsyncpa [#allocation7], 0
    %s12 = scalar_lea.sflag [#allocation7], 1
    %13 = vsyncpa %s12, 0
    %14 = vsyncpa [#allocation5], 0
    %s15 = scalar_lea.sflag [#allocation5], 1
    %16 = vsyncpa %s15, 0
    loop: start=0, step=1, limit=4
    $region2: #{tpu_custom_call.1} parent=1 // loop_pre_header
      _
    $region3: #{tpu_custom_call.1} parent=1 // loop_header
      %s18 = sphi 0, %s22
      %p19 = scmp.ge.s32.totalorder %s18, 4
      %s25 = sphi 0, %s44
      %s26 = sphi 0, %s40
      %s27 = sphi 0, %s36
      %s28 = sphi 0, %s25
      %s29 = sphi 0, %s26
      %s30 = sphi 0, %s27
      %s31 = sphi 0, %s28
      %s32 = sphi 0, %s29
      %s33 = sphi 0, %s30
      %s51 = sphi 0, %s53
      %s54 = sphi 0, %s51
      %s55 = sphi 0, %s54
      %s71 = sphi 0, %s55
      %s81 = sphi 0, %s83
      %s84 = sphi 0, %s81
      %s85 = sphi 0, %s84
      %s101 = sphi 0, %s85
      %s111 = sphi 0, %s113
      %s114 = sphi 0, %s111
      %s115 = sphi 0, %s114
      %s131 = sphi 0, %s115
      %s139 = sphi 0, %s141
      %s142 = sphi 0, %s139
      %s143 = sphi 0, %s142
      %s159 = sphi 0, %s143
    $region4: #{tpu_custom_call.1} parent=1 // loop_header_branch
      %21 = sbr.rel (%p19) target = $region8
    $region5: #{tpu_custom_call.1} parent=1 // loop_body
      %s23 = ssub.s32 %s18, 1
      %s24 = ssub.s32 %s18, 2
      %s34 = sadd.s32 1, %s27
      %p35 = scmp.ge.s32.totalorder %s34, 1
      %s36 = scalar_select %p35, 0, %s34
      %s37 = sadd.s32 1, %s26
      %s38 = scalar_select %p35, %s37, %s26
      %p39 = scmp.ge.s32.totalorder %s38, 1
      %s40 = scalar_select %p39, 0, %s38
      %s41 = sadd.s32 1, %s25
      %s42 = scalar_select %p39, %s41, %s25
      %p43 = scmp.ge.s32.totalorder %s42, 2
      %s44 = scalar_select %p43, 0, %s42
      %s45 = sadd.s32 %s26, %s27
      %s46 = sadd.s32 %s40, %s36
      %s47 = ssub.s32 %s25, %s44
      %s48 = ssub.s32 %s45, %s46
      %s49 = sor.u32 %s47, %s48
      %p50 = scmp.eq.s32.totalorder %s49, 0
      %s52 = sadd.s32 %s51, 1
      %s53 = scalar_select %p50, %s51, %s52
      %p56 = pneg %p50
      %p57 = scmp.eq.s32.totalorder %s18, 1
      %p58 = por %p56, %p57
      %p59 = scmp.ne.s32.totalorder %s51, %s54
      %p60 = scmp.eq.s32.totalorder %s18, 0
      %p61 = por %p59, %p60
      %p62 = scmp.ne.s32.totalorder %s51, %s54
      %p63 = scmp.eq.s32.totalorder %s23, 1
      %p64 = por %p62, %p63
      %p65 = scmp.ne.s32.totalorder %s54, %s55
      %p66 = scmp.eq.s32.totalorder %s23, 0
      %p67 = por %p65, %p66
      %p68 = scmp.ne.s32.totalorder %s54, %s55
      %p69 = scmp.eq.s32.totalorder %s24, 1
      %p70 = por %p68, %p69
      %p72 = scmp.ne.s32.totalorder %s55, %s71
      %p73 = scmp.eq.s32.totalorder %s24, 0
      %p74 = por %p72, %p73
      %s75 = sadd.s32 %s26, %s27
      %s76 = sadd.s32 %s40, %s36
      %s77 = ssub.s32 %s25, %s44
      %s78 = ssub.s32 %s75, %s76
      %s79 = sor.u32 %s77, %s78
      %p80 = scmp.eq.s32.totalorder %s79, 0
      %s82 = sadd.s32 %s81, 1
      %s83 = scalar_select %p80, %s81, %s82
      %p86 = pneg %p80
      %p87 = scmp.eq.s32.totalorder %s18, 1
      %p88 = por %p86, %p87
      %p89 = scmp.ne.s32.totalorder %s81, %s84
      %p90 = scmp.eq.s32.totalorder %s18, 0
      %p91 = por %p89, %p90
      %p92 = scmp.ne.s32.totalorder %s81, %s84
      %p93 = scmp.eq.s32.totalorder %s23, 1
      %p94 = por %p92, %p93
      %p95 = scmp.ne.s32.totalorder %s84, %s85
      %p96 = scmp.eq.s32.totalorder %s23, 0
      %p97 = por %p95, %p96
      %p98 = scmp.ne.s32.totalorder %s84, %s85
      %p99 = scmp.eq.s32.totalorder %s24, 1
      %p100 = por %p98, %p99
      %p102 = scmp.ne.s32.totalorder %s85, %s101
      %p103 = scmp.eq.s32.totalorder %s24, 0
      %p104 = por %p102, %p103
      %s105 = sadd.s32 %s26, %s27
      %s106 = sadd.s32 %s40, %s36
      %s107 = ssub.s32 %s25, %s44
      %s108 = ssub.s32 %s105, %s106
      %s109 = sor.u32 %s107, %s108
      %p110 = scmp.eq.s32.totalorder %s109, 0
      %s112 = sadd.s32 %s111, 1
      %s113 = scalar_select %p110, %s111, %s112
      %p116 = pneg %p110
      %p117 = scmp.eq.s32.totalorder %s18, 1
      %p118 = por %p116, %p117
      %p119 = scmp.ne.s32.totalorder %s111, %s114
      %p120 = scmp.eq.s32.totalorder %s18, 0
      %p121 = por %p119, %p120
      %p122 = scmp.ne.s32.totalorder %s111, %s114
      %p123 = scmp.eq.s32.totalorder %s23, 1
      %p124 = por %p122, %p123
      %p125 = scmp.ne.s32.totalorder %s114, %s115
      %p126 = scmp.eq.s32.totalorder %s23, 0
      %p127 = por %p125, %p126
      %p128 = scmp.ne.s32.totalorder %s114, %s115
      %p129 = scmp.eq.s32.totalorder %s24, 1
      %p130 = por %p128, %p129
      %p132 = scmp.ne.s32.totalorder %s115, %s131
      %p133 = scmp.eq.s32.totalorder %s24, 0
      %p134 = por %p132, %p133
      %s135 = ssub.s32 %s25, %s44
      %s136 = ssub.s32 %s26, %s40
      %s137 = sor.u32 %s135, %s136
      %p138 = scmp.eq.s32.totalorder %s137, 0
      %s140 = sadd.s32 %s139, 1
      %s141 = scalar_select %p138, %s139, %s140
      %p144 = pneg %p138
      %p145 = scmp.eq.s32.totalorder %s18, 1
      %p146 = por %p144, %p145
      %p147 = scmp.ne.s32.totalorder %s139, %s142
      %p148 = scmp.eq.s32.totalorder %s18, 0
      %p149 = por %p147, %p148
      %p150 = scmp.ne.s32.totalorder %s139, %s142
      %p151 = scmp.eq.s32.totalorder %s23, 1
      %p152 = por %p150, %p151
      %p153 = scmp.ne.s32.totalorder %s142, %s143
      %p154 = scmp.eq.s32.totalorder %s23, 0
      %p155 = por %p153, %p154
      %p156 = scmp.ne.s32.totalorder %s142, %s143
      %p157 = scmp.eq.s32.totalorder %s24, 1
      %p158 = por %p156, %p157
      %p160 = scmp.ne.s32.totalorder %s143, %s159
      %p161 = scmp.eq.s32.totalorder %s24, 0
      %p162 = por %p160, %p161
      %p163 = scmp.le.s32.totalorder 1, %s18
      %p164 = scmp.lt.s32.totalorder %s18, 3
      %p165 = pnand %p163, %p164
      %p166 = pneg %p165
      // Predicated region
      $region9: #{tpu_custom_call.1} parent=5 // pred_check
        _
      $region10: #{tpu_custom_call.1} parent=5 // pred_check_branch
        %168 = sbr.rel (%p165) target = $region12
      $region11: #{tpu_custom_call.1} parent=5 // pred_region
        %s169 = ssub.s32 %s18, 1
      $region12: #{tpu_custom_call.1} parent=5 // pred_fallthru
        _
      %p170 = scmp.lt.s32.totalorder %s18, 2
      // Predicated region
      $region13: #{tpu_custom_call.1} parent=5 // pred_check
        %p171 = pneg %p170
      $region14: #{tpu_custom_call.1} parent=5 // pred_check_branch
        %173 = sbr.rel (%p171) target = $region16
      $region15: #{tpu_custom_call.1} parent=5 // pred_region
        // Predicated region
        $region17: #{tpu_custom_call.1} parent=15 // pred_check
          %p174 = pneg %p61
        $region18: #{tpu_custom_call.1} parent=15 // pred_check_branch
          %176 = sbr.rel (%p174) target = $region20
        $region19: #{tpu_custom_call.1} parent=15 // pred_region
          %s177 = sand.u32 %s51, 1
          %s178 = scalar_lea.sflag [#allocation4], %s177
          %s179 = sand.u32 %s51, 1
          %s180 = smul.addr %s179, 64
          %s181 = scalar_lea.vmem [#allocation3], %s180
          %s182 = sadd.s32 %s26, %s27
          %s183 = smul.u32 2, %s182
          %s185 = ssub.s32 1024, 1024
          %186 = vsyncadd %s178, %s185
          %s187 = smul.addr %s25, 8
          %s188 = sadd.s32 %s183, %s187
          %s189 = smul.addr %s188, 128
          %s190 = scalar_lea.hbm %s0, %s189
          %s191 = sshll.u32 %s181, 4
          %s192 = int_to_ptr.vmem [resolvable:$true] %s191
          %197 = dma.hbm_to_vmem [thread:$0]  %s190, 1024, %s192, %s178, 128, 128, 8
        $region20: #{tpu_custom_call.1} parent=15 // pred_fallthru
          _
        // Predicated region
        $region21: #{tpu_custom_call.1} parent=15 // pred_check
          %p198 = pneg %p91
        $region22: #{tpu_custom_call.1} parent=15 // pred_check_branch
          %200 = sbr.rel (%p198) target = $region24
        $region23: #{tpu_custom_call.1} parent=15 // pred_region
          %s201 = sand.u32 %s18, 1
          %s202 = scalar_lea.sflag [#allocation7], %s201
          %s203 = sand.u32 %s81, 1
          %s204 = smul.addr %s203, 16
          %s205 = scalar_lea.vmem [#allocation6], %s204
          %s206 = sadd.s32 %s26, %s27
          %s207 = smul.u32 2, %s206
          %s209 = ssub.s32 256, 256
          %210 = vsyncadd %s202, %s209
          %s211 = smul.addr %s25, 2
          %s212 = sadd.s32 %s207, %s211
          %s213 = smul.addr %s212, 128
          %s214 = scalar_lea.hbm %s1, %s213
          %s215 = sshll.u32 %s205, 4
          %s216 = int_to_ptr.vmem [resolvable:$true] %s215
          %221 = dma.hbm_to_vmem [thread:$0]  %s214, 256, %s216, %s202, 128, 128, 8
        $region24: #{tpu_custom_call.1} parent=15 // pred_fallthru
          _
        // Predicated region
        $region25: #{tpu_custom_call.1} parent=15 // pred_check
          %p222 = pneg %p121
        $region26: #{tpu_custom_call.1} parent=15 // pred_check_branch
          %224 = sbr.rel (%p222) target = $region28
        $region27: #{tpu_custom_call.1} parent=15 // pred_region
          %s225 = sand.u32 %s18, 1
          %s226 = scalar_lea.sflag [#allocation7], %s225
          %s227 = sand.u32 %s111, 1
          %s228 = smul.addr %s227, 16
          %s229 = scalar_lea.vmem [#allocation8], %s228
          %s230 = sadd.s32 %s26, %s27
          %s231 = smul.u32 2, %s230
          %s233 = ssub.s32 256, 256
          %234 = vsyncadd %s226, %s233
          %s235 = smul.addr %s25, 2
          %s236 = sadd.s32 %s231, %s235
          %s237 = smul.addr %s236, 128
          %s238 = scalar_lea.hbm %s2, %s237
          %s239 = sshll.u32 %s229, 4
          %s240 = int_to_ptr.vmem [resolvable:$true] %s239
          %245 = dma.hbm_to_vmem [thread:$0]  %s238, 256, %s240, %s226, 128, 128, 8
        $region28: #{tpu_custom_call.1} parent=15 // pred_fallthru
          _
      $region16: #{tpu_custom_call.1} parent=5 // pred_fallthru
        _
      %p246 = scmp.le.s32.totalorder 1, %s18
      %p247 = scmp.lt.s32.totalorder %s18, 3
      %p248 = pnand %p246, %p247
      %p249 = pneg %p248
      // Predicated region
      $region29: #{tpu_custom_call.1} parent=5 // pred_check
        _
      $region30: #{tpu_custom_call.1} parent=5 // pred_check_branch
        %251 = sbr.rel (%p248) target = $region32
      $region31: #{tpu_custom_call.1} parent=5 // pred_region
        %s252 = ssub.s32 %s18, 1
        %s253 = sand.u32 %s54, 1
        %s254 = scalar_lea.sflag [#allocation4], %s253
        %s255 = sand.u32 %s54, 1
        %s256 = smul.addr %s255, 64
        %s257 = scalar_lea.vmem [#allocation3], %s256
        // Predicated region
        $region33: #{tpu_custom_call.1} parent=31 // pred_check
          %p258 = pneg %p67
        $region34: #{tpu_custom_call.1} parent=31 // pred_check_branch
          %260 = sbr.rel (%p258) target = $region36
        $region35: #{tpu_custom_call.1} parent=31 // pred_region
          %261 = dma.done %s254, 1024
        $region36: #{tpu_custom_call.1} parent=31 // pred_fallthru
          _
        %s262 = sand.u32 %s23, 1
        %s263 = scalar_lea.sflag [#allocation7], %s262
        %s264 = sand.u32 %s84, 1
        %s265 = smul.addr %s264, 16
        %s266 = scalar_lea.vmem [#allocation6], %s265
        // Predicated region
        $region37: #{tpu_custom_call.1} parent=31 // pred_check
          %p267 = pneg %p97
        $region38: #{tpu_custom_call.1} parent=31 // pred_check_branch
          %269 = sbr.rel (%p267) target = $region40
        $region39: #{tpu_custom_call.1} parent=31 // pred_region
          %270 = dma.done %s263, 256
        $region40: #{tpu_custom_call.1} parent=31 // pred_fallthru
          _
        %s271 = sand.u32 %s23, 1
        %s272 = scalar_lea.sflag [#allocation7], %s271
        %s273 = sand.u32 %s114, 1
        %s274 = smul.addr %s273, 16
        %s275 = scalar_lea.vmem [#allocation8], %s274
        // Predicated region
        $region41: #{tpu_custom_call.1} parent=31 // pred_check
          %p276 = pneg %p127
        $region42: #{tpu_custom_call.1} parent=31 // pred_check_branch
          %278 = sbr.rel (%p276) target = $region44
        $region43: #{tpu_custom_call.1} parent=31 // pred_region
          %279 = dma.done %s272, 256
        $region44: #{tpu_custom_call.1} parent=31 // pred_fallthru
          _
        %s280 = sand.u32 %s54, 1
        %s281 = scalar_lea.sflag [#allocation4], %s280
        %s282 = sand.u32 %s54, 1
        %s283 = smul.addr %s282, 64
        %s284 = scalar_lea.vmem [#allocation3], %s283
        %p285 = pneg %p67
        %p286 = pneg %p64
        %s287 = sand.u32 %s23, 1
        %s288 = scalar_lea.sflag [#allocation7], %s287
        %s289 = sand.u32 %s84, 1
        %s290 = smul.addr %s289, 16
        %s291 = scalar_lea.vmem [#allocation6], %s290
        %p292 = pneg %p97
        %p293 = pneg %p94
        %s294 = sand.u32 %s23, 1
        %s295 = scalar_lea.sflag [#allocation7], %s294
        %s296 = sand.u32 %s114, 1
        %s297 = smul.addr %s296, 16
        %s298 = scalar_lea.vmem [#allocation8], %s297
        %p299 = pneg %p127
        %p300 = pneg %p124
        %p301 = pneg %p155
        %p302 = pneg %p152
        %s303 = sand.u32 %s142, 1
        %s304 = scalar_lea.sflag [#allocation5], %s303
        %s305 = sand.u32 %s142, 1
        %s306 = smul.addr %s305, 8
        %s307 = scalar_lea.vmem [#allocation9], %s306
        %s308 = sadd.s32 %s29, %s30
        %s309 = smul.u32 2, %s308
        %s310 = sadd.s32 %s29, %s30
        %s311 = smul.u32 2, %s310
        %s312 = sadd.s32 %s29, %s30
        %s313 = smul.u32 2, %s312
        %p314 = scmp.eq.s32.totalorder %s30, 0
        // Predicated region
        $region45: #{tpu_custom_call.1} parent=31 // pred_check
          %p315 = pneg %p314
        $region46: #{tpu_custom_call.1} parent=31 // pred_check_branch
          %317 = sbr.rel (%p315) target = $region48
        $region47: #{tpu_custom_call.1} parent=31 // pred_region
          %318 = vst [vmem:[#allocation2] sm:$0xff] 0.0
          %319 = vst [vmem:[#allocation2 + $0x8] sm:$0xff] 0.0
        $region48: #{tpu_custom_call.1} parent=31 // pred_fallthru
          _
        %v320 = vld [vmem:[%s266] sm:$0xff]
        %v321 = vld [vmem:[%s266 + $0x8] sm:$0xff]
        %v322 = vld [vmem:[%s275] sm:$0xff]
        %v323 = vld [vmem:[%s275 + $0x8] sm:$0xff]
        %v324 = vld [vmem:[%s257] sm:$0xff]
        %v325 = vld [vmem:[%s257 + $0x8] sm:$0xff]
        %s326 = scalar_lea.vmem %s257, 16 [#allocation3]
        %v327 = vld [vmem:[%s326] sm:$0xff]
        %v328 = vld [vmem:[%s326 + $0x8] sm:$0xff]
        %v329 = vmax.f32 %v324, %v327
        %v330 = vmax.f32 %v325, %v328
        %s331 = scalar_lea.vmem %s257, 32 [#allocation3]
        %v332 = vld [vmem:[%s331] sm:$0xff]
        %v333 = vld [vmem:[%s331 + $0x8] sm:$0xff]
        %v334 = vmax.f32 %v329, %v332
        %v335 = vmax.f32 %v330, %v333
        %s336 = scalar_lea.vmem %s257, 48 [#allocation3]
        %v337 = vld [vmem:[%s336] sm:$0xff]
        %v338 = vld [vmem:[%s336 + $0x8] sm:$0xff]
        %v339 = vmax.f32 %v334, %v337
        %v340 = vmax.f32 %v335, %v338
        %v341 = vsub.f32 %v324, %v339
        %v342 = vsub.f32 %v325, %v340
        %v343 = vmul.f32 %v341, 1.442695
        %v344 = vpow.pop %v343
        %v345 = vmul.f32 %v342, 1.442695
        %v346 = vpow.pop %v345
        %v347 = vadd.f32 %v344, 0.0
        %v348 = vadd.f32 %v346, 0.0
        %vm349 = vcmp.eq.s32.totalorder %v320, 0
        %vm350 = vcmp.eq.s32.totalorder %v321, 0
        %v351 = vsel %vm349, %v324, 0.0
        %v352 = vsel %vm350, %v325, 0.0
        %v353 = vadd.f32 %v351, 0.0
        %v354 = vadd.f32 %v352, 0.0
        %v355 = vsub.f32 %v327, %v339
        %v356 = vsub.f32 %v328, %v340
        %v357 = vmul.f32 %v355, 1.442695
        %v358 = vpow.pop %v357
        %v359 = vmul.f32 %v356, 1.442695
        %v360 = vpow.pop %v359
        %v361 = vadd.f32 %v347, %v358
        %v362 = vadd.f32 %v348, %v360
        %vm363 = vcmp.eq.s32.totalorder %v320, 1
        %vm364 = vcmp.eq.s32.totalorder %v321, 1
        %v365 = vsel %vm363, %v327, 0.0
        %v366 = vsel %vm364, %v328, 0.0
        %v367 = vadd.f32 %v353, %v365
        %v368 = vadd.f32 %v354, %v366
        %v369 = vsub.f32 %v332, %v339
        %v370 = vsub.f32 %v333, %v340
        %v371 = vmul.f32 %v369, 1.442695
        %v372 = vpow.pop %v371
        %v373 = vmul.f32 %v370, 1.442695
        %v374 = vpow.pop %v373
        %v375 = vadd.f32 %v361, %v372
        %v376 = vadd.f32 %v362, %v374
        %vm377 = vcmp.eq.s32.totalorder %v320, 2
        %vm378 = vcmp.eq.s32.totalorder %v321, 2
        %v379 = vsel %vm377, %v332, 0.0
        %v380 = vsel %vm378, %v333, 0.0
        %v381 = vadd.f32 %v367, %v379
        %v382 = vadd.f32 %v368, %v380
        %v383 = vsub.f32 %v337, %v339
        %v384 = vsub.f32 %v338, %v340
        %v385 = vmul.f32 %v383, 1.442695
        %v386 = vpow.pop %v385
        %v387 = vmul.f32 %v384, 1.442695
        %v388 = vpow.pop %v387
        %v389 = vadd.f32 %v375, %v386
        %v390 = vadd.f32 %v376, %v388
        %vm391 = vcmp.eq.s32.totalorder %v320, 3
        %vm392 = vcmp.eq.s32.totalorder %v321, 3
        %v393 = vsel %vm391, %v337, 0.0
        %v394 = vsel %vm392, %v338, 0.0
        %v395 = vadd.f32 %v381, %v393
        %v396 = vadd.f32 %v382, %v394
        %v397 = vlog2.pop %v389
        %v398 = vmul.f32 %v397, 0.6931472
        %v399 = vlog2.pop %v390
        %v400 = vmul.f32 %v399, 0.6931472
        %v401 = vadd.f32 %v398, %v339
        %v402 = vadd.f32 %v400, %v340
        %v403 = vsub.f32 %v401, %v395
        %v404 = vsub.f32 %v402, %v396
        %v405 = vmul.f32 %v403, %v322
        %v406 = vmul.f32 %v404, %v323
        %s407 = sadd.s32 %s29, %s30
        %s408 = smul.u32 %s407, 16
        %s409 = sadd.s32 %s408, 16
        %p410 = scmp.le.s32.totalorder %s409, 16
        // Predicated region
        $region49: #{tpu_custom_call.1} parent=31 // pred_check
          %p411 = pneg %p410
        $region50: #{tpu_custom_call.1} parent=31 // pred_check_branch
          %413 = sbr.rel (%p411) target = $region52
        $region51: #{tpu_custom_call.1} parent=31 // pred_region
          %v414 = vld [vmem:[#allocation2] sm:$0xff]
          %v415 = vld [vmem:[#allocation2 + $0x8] sm:$0xff]
          %v416 = vadd.f32 %v414, %v405
          %v417 = vadd.f32 %v415, %v406
          %418 = vst [vmem:[#allocation2] sm:$0xff] %v416
          %419 = vst [vmem:[#allocation2 + $0x8] sm:$0xff] %v417
        $region52: #{tpu_custom_call.1} parent=31 // pred_fallthru
          _
        %p420 = scmp.gt.s32.totalorder %s409, 16
        // Predicated region
        $region53: #{tpu_custom_call.1} parent=31 // pred_check
          %p421 = pneg %p420
        $region54: #{tpu_custom_call.1} parent=31 // pred_check_branch
          %423 = sbr.rel (%p421) target = $region56
        $region55: #{tpu_custom_call.1} parent=31 // pred_region
          %v424 = vlaneseq
          %v425 = vshrl.u32 %v424, 7
          %v426 = vadd.s32 %v425, 8
          %v427 = vstv %s408
          %v428 = vadd.s32 %v427, %v425
          %v429 = vadd.s32 %v427, %v426
          %v430 = vld [vmem:[#allocation2] sm:$0xff]
          %v431 = vld [vmem:[#allocation2 + $0x8] sm:$0xff]
          %vm432 = vcmp.lt.s32.totalorder %v428, 16
          %vm433 = vcmp.lt.s32.totalorder %v429, 16
          %v434 = vsel %vm432, %v405, 0.0
          %v435 = vsel %vm433, %v406, 0.0
          %v436 = vadd.f32 %v430, %v434
          %v437 = vadd.f32 %v431, %v435
          %438 = vst [vmem:[#allocation2] sm:$0xff] %v436
          %439 = vst [vmem:[#allocation2 + $0x8] sm:$0xff] %v437
        $region56: #{tpu_custom_call.1} parent=31 // pred_fallthru
          _
        // Predicated region
        $region57: #{tpu_custom_call.1} parent=31 // pred_check
          %p440 = pneg %p314
        $region58: #{tpu_custom_call.1} parent=31 // pred_check_branch
          %442 = sbr.rel (%p440) target = $region60
        $region59: #{tpu_custom_call.1} parent=31 // pred_region
          %v443 = vld [vmem:[#allocation2] sm:$0xff]
          %v444 = vld [vmem:[#allocation2 + $0x8] sm:$0xff]
          %v445 = vadd.f32 %v443, %v444
          %446 = vadd.xlane.f32.xlu0 %v445
          %v447 = vpop.xlane.xlu0 %446
          %v448 = vrot.slane %v447, 4
          %v449 = vadd.f32 %v447, %v448
          %v450 = vrot.slane %v449, 2
          %v451 = vadd.f32 %v449, %v450
          %v452 = vrot.slane %v451, 1
          %v453 = vadd.f32 %v451, %v452
          %s454 = vtos %v453
          %v455 = vstv %s454
          %456 = vst [vmem:[%s307] sm:$0xff] %v455
        $region60: #{tpu_custom_call.1} parent=31 // pred_fallthru
          _
        %s457 = sand.u32 %s142, 1
        %s458 = scalar_lea.sflag [#allocation5], %s457
        %s459 = sand.u32 %s142, 1
        %s460 = smul.addr %s459, 8
        %s461 = scalar_lea.vmem [#allocation9], %s460
        // Predicated region
        $region61: #{tpu_custom_call.1} parent=31 // pred_check
          %p462 = pneg %p152
        $region62: #{tpu_custom_call.1} parent=31 // pred_check_branch
          %464 = sbr.rel (%p462) target = $region64
        $region63: #{tpu_custom_call.1} parent=31 // pred_region
          %s466 = ssub.s32 128, 128
          %467 = vsyncadd %s458, %s466
          %s468 = sadd.s32 %s29, %s28
          %s469 = smul.addr %s468, 128
          %s470 = scalar_lea.hbm %s3, %s469
          %s472 = sshll.u32 %s461, 4
          %s473 = int_to_ptr.vmem [resolvable:$true] %s472
          %475 = dma.vmem_to_hbm [thread:$0]  %s473, 128, %s470, %s458
        $region64: #{tpu_custom_call.1} parent=31 // pred_fallthru
          _
      $region32: #{tpu_custom_call.1} parent=5 // pred_fallthru
        _
      %p476 = scmp.le.s32.totalorder 2, %s18
      // Predicated region
      $region65: #{tpu_custom_call.1} parent=5 // pred_check
        %p477 = pneg %p476
      $region66: #{tpu_custom_call.1} parent=5 // pred_check_branch
        %479 = sbr.rel (%p477) target = $region68
      $region67: #{tpu_custom_call.1} parent=5 // pred_region
        %s480 = ssub.s32 %s18, 2
        // Predicated region
        $region69: #{tpu_custom_call.1} parent=67 // pred_check
          %p481 = pneg %p158
        $region70: #{tpu_custom_call.1} parent=67 // pred_check_branch
          %483 = sbr.rel (%p481) target = $region72
        $region71: #{tpu_custom_call.1} parent=67 // pred_region
          %s484 = sand.u32 %s143, 1
          %s485 = scalar_lea.sflag [#allocation5], %s484
          %s486 = sand.u32 %s143, 1
          %s487 = smul.addr %s486, 8
          %s488 = scalar_lea.vmem [#allocation9], %s487
          %489 = dma.done %s485, 128
        $region72: #{tpu_custom_call.1} parent=67 // pred_fallthru
          _
      $region68: #{tpu_custom_call.1} parent=5 // pred_fallthru
        _
    $region6: #{tpu_custom_call.1} parent=1 // loop_footer
      %s22 = sadd.s32 1, %s18
    $region7: #{tpu_custom_call.1} parent=1 // loop_footer_branch
      %17 = sbr.rel target = $region3
    $region8: #{tpu_custom_call.1} parent=1 // loop_exit
      _
    %490 = vsyncpa [#allocation4], 1
    %s491 = scalar_lea.sflag [#allocation4], 1
    %492 = vsyncpa %s491, 1
    %493 = vsyncpa [#allocation7], 1
    %s494 = scalar_lea.sflag [#allocation7], 1
    %495 = vsyncpa %s494, 1
    %496 = vsyncpa [#allocation5], 1
    %s497 = scalar_lea.sflag [#allocation5], 1
    %498 = vsyncpa %s497, 1

</llo_original>
